<compile_context>
chip_gen: v7x
topology: tpu7x:2x2x1
jax: 0.10.0
libtpu: 0.0.40
codegen_flags: <defaults>
</compile_context>

<pallas_src>
import jax
import jax.numpy as jnp
from jax import lax
from jax.experimental import pallas as pl
from jax.experimental.pallas import tpu as pltpu

EPS = 1e-5
LANE = 128

_COMPILER_PARAMS = pltpu.CompilerParams(
    dimension_semantics=("parallel", "parallel"),   # megacore-shardable on v7x
    vmem_limit_bytes=48 * 1024 * 1024,              # <= v7x 64 MiB; raise on v5e/v6e
)


def _round_up(x, m):
    return (x + m - 1) // m * m


def _pick_band_rows(h, w, target_rows):
    """Largest divisor TH of H with TH*W sublane-aligned and TH*W <= target."""
    cands = [d for d in range(1, h + 1) if h % d == 0 and (d * w) % 8 == 0]
    fitting = [d for d in cands if d * w <= target_rows]
    return max(fitting) if fitting else min(cands)


def _cost(flops, bytes_accessed):
    return pl.CostEstimate(flops=int(flops), transcendentals=0,
                           bytes_accessed=int(bytes_accessed))


# ---------------- Pallas kernels ----------------

def conv1_kernel(x_ref, w1_ref, h1_ref, st_ref):
    """1x1 conv (bf16 MXU matmul, f32 accum) + BN1 partial statistics."""
    h = jnp.dot(x_ref[...], w1_ref[...], preferred_element_type=jnp.float32)
    h1_ref[...] = h.astype(jnp.bfloat16)
    st_ref[0] = jnp.concatenate(
        [jnp.sum(h, axis=0, keepdims=True),
         jnp.sum(h * h, axis=0, keepdims=True)], axis=0)


def conv2_kernel(band_ref, top_ref, bot_ref, w2c_ref, s1_ref, t1_ref,
                 h2_ref, st_ref, cat_ref):
    """BN1+ReLU -> 3x3 conv over one row band of one image.

    cat_ref holds, per pixel, the channel-concatenated triple
    [a1(w-1) | a1(w) | a1(w+1)] (zeros outside the image), so the 9-tap conv
    becomes 3 deep MXU dots (K = 3*Cmid) whose operands are contiguous slices
    along the major (row) axis only.  The 1-row top/bottom halos arrive via
    extra clamped BlockSpecs and are masked to zero at the image boundary.
    """
    b = pl.program_id(1)
    nb = pl.num_programs(1)
    _, th, w, c = band_ref.shape
    s1 = s1_ref[0]
    t1 = t1_ref[0]

    def bn_relu(rows):                                   # rows: (R, W, C) bf16
        return jnp.maximum(rows.astype(jnp.float32) * s1 + t1, 0.0)

    a_top = jnp.where(b > 0, bn_relu(top_ref[0]), 0.0)           # (1, W, C)
    a_bot = jnp.where(b < nb - 1, bn_relu(bot_ref[0]), 0.0)      # (1, W, C)
    a = jnp.concatenate([a_top, bn_relu(band_ref[0]), a_bot], axis=0)  # (TH+2,W,C)

    col = lax.broadcasted_iota(jnp.int32, (1, w, 1), 1)
    left = jnp.where(col >= 1, pltpu.roll(a, 1, axis=1), 0.0)          # a1[.., w-1]
    right = jnp.where(col <= w - 2, pltpu.roll(a, w - 1, axis=1), 0.0)  # a1[.., w+1]
    # single aligned store of the whole scratch (no zero pass, cast once)
    cat_ref[...] = jnp.concatenate([left, a, right], axis=-1).astype(jnp.bfloat16)

    acc = jnp.zeros((th * w, c), jnp.float32)
    for dy in range(3):                                  # contiguous major-axis slices
        slab = cat_ref[dy:dy + th].reshape(th * w, 3 * c)
        acc = acc + jnp.dot(slab, w2c_ref[dy], preferred_element_type=jnp.float32)

    h2_ref[...] = acc.astype(jnp.bfloat16)
    st_ref[0] = jnp.concatenate(
        [jnp.sum(acc, axis=0, keepdims=True),
         jnp.sum(acc * acc, axis=0, keepdims=True)], axis=0)


def conv3_kernel(h2_ref, s2_ref, t2_ref, w3_ref, h3_ref, st_ref):
    """BN2+ReLU -> 1x1 expansion conv (MXU matmul) + BN3 partial statistics."""
    a2 = jnp.maximum(h2_ref[...].astype(jnp.float32) * s2_ref[0] + t2_ref[0], 0.0)
    h = jnp.dot(a2.astype(jnp.bfloat16), w3_ref[...],
                preferred_element_type=jnp.float32)
    h3_ref[...] = h.astype(jnp.bfloat16)
    st_ref[0] = jnp.concatenate(
        [jnp.sum(h, axis=0, keepdims=True),
         jnp.sum(h * h, axis=0, keepdims=True)], axis=0)


def residual_kernel(h3_ref, x_ref, s3_ref, t3_ref, o_ref):
    """BN3 + residual add + final ReLU (bf16 reads, f32 math & output)."""
    y = (h3_ref[...].astype(jnp.float32) * s3_ref[0] + t3_ref[0]
         + x_ref[...].astype(jnp.float32))
    o_ref[...] = jnp.maximum(y, 0.0)


# ---------------- wrapper ----------------

def _bn_scale_shift(stats_tiles, count, gamma, beta):
    """Fold training-mode BatchNorm (batch stats, biased var) into scale/shift."""
    s = jnp.sum(stats_tiles, axis=0)                 # (2, C): [sum, sum_sq]
    mean = s[0] / count
    var = jnp.maximum(s[1] / count - mean * mean, 0.0)
    scale = gamma * lax.rsqrt(var + EPS)
    shift = beta - mean * scale
    return scale[None, :], shift[None, :]


def bottleneck_forward(x_nchw, params, band_rows_target=2048):
    N, Cin, H, W = x_nchw.shape
    Cmid = params["w1"].shape[1]
    Cout = params["w3"].shape[1]
    assert Cin == Cout, "downsample=None requires in_channel == out_channel*expansion"
    assert (H * W) % 8 == 0, "sublane alignment"  # TODO(synk): pad W otherwise
    # TODO(synk): stride>1 / non-None downsample branch is not implemented.

    CinP = _round_up(Cin, LANE)
    CmidP = _round_up(Cmid, LANE)
    CoutP = _round_up(Cout, LANE)

    TH = _pick_band_rows(H, W, band_rows_target)   # rows of the image per band
    nb = H // TH
    TM = TH * W                                    # flat rows per grid step
    M = N * H * W
    grid = (N, nb)
    nt = N * nb
    count = jnp.float32(M)

    # --- layout glue (once per block; for a chained network keep this
    #     lane-padded bf16 channels-last layout as the persistent format). ---
    x_pad = jnp.pad(jnp.transpose(x_nchw, (0, 2, 3, 1)).reshape(M, Cin),
                    ((0, 0), (0, CinP - Cin))).astype(jnp.bfloat16)

    # lane-padded parameters (padded BN gamma entries are 0 so padded channels
    # stay exactly zero end-to-end)
    w1 = jnp.pad(params["w1"], ((0, CinP - Cin), (0, CmidP - Cmid))).astype(jnp.bfloat16)
    w2p = jnp.pad(params["w2"], ((0, 0), (0, 0),
                                 (0, CmidP - Cmid), (0, CmidP - Cmid))).astype(jnp.bfloat16)
    w2cat = w2p.reshape(3, 3 * CmidP, CmidP)   # [dy] = [W2[dy,0]; W2[dy,1]; W2[dy,2]]
    w3 = jnp.pad(params["w3"], ((0, CmidP - Cmid), (0, CoutP - Cout))).astype(jnp.bfloat16)
    g1 = jnp.pad(params["g1"].astype(jnp.float32), (0, CmidP - Cmid))
    b1 = jnp.pad(params["b1"].astype(jnp.float32), (0, CmidP - Cmid))
    g2 = jnp.pad(params["g2"].astype(jnp.float32), (0, CmidP - Cmid))
    b2 = jnp.pad(params["b2"].astype(jnp.float32), (0, CmidP - Cmid))
    g3 = jnp.pad(params["g3"].astype(jnp.float32), (0, CoutP - Cout))
    b3 = jnp.pad(params["b3"].astype(jnp.float32), (0, CoutP - Cout))

    row_idx = lambda n, b: (n * nb + b, 0)
    st_idx = lambda n, b: (n * nb + b, 0, 0)

    # ---- K1: conv1 (1x1) + BN1 partial stats ----
    h1, st1 = pl.pallas_call(
        conv1_kernel,
        grid=grid,
        in_specs=[pl.BlockSpec((TM, CinP), row_idx),
                  pl.BlockSpec((CinP, CmidP), lambda n, b: (0, 0))],
        out_specs=(pl.BlockSpec((TM, CmidP), row_idx),
                   pl.BlockSpec((1, 2, CmidP), st_idx)),
        out_shape=(jax.ShapeDtypeStruct((M, CmidP), jnp.bfloat16),
                   jax.ShapeDtypeStruct((nt, 2, CmidP), jnp.float32)),
        compiler_params=_COMPILER_PARAMS,
        cost_estimate=_cost(2 * M * CinP * CmidP, M * (CinP + CmidP) * 2),
    )(x_pad, w1)
    s1, t1 = _bn_scale_shift(st1, count, g1, b1)

    # ---- K2: BN1+ReLU -> conv2 (3x3), row-band tiled with 1-row halos ----
    h1_nhwc = h1.reshape(N, H, W, CmidP)                  # free metadata reshape
    band_spec = pl.BlockSpec((1, TH, W, CmidP), lambda n, b: (n, b, 0, 0))
    top_spec = pl.BlockSpec((1, 1, W, CmidP),
                            lambda n, b: (n, jnp.maximum(b * TH - 1, 0), 0, 0))
    bot_spec = pl.BlockSpec((1, 1, W, CmidP),
                            lambda n, b: (n, jnp.minimum((b + 1) * TH, H - 1), 0, 0))
    h2, st2 = pl.pallas_call(
        conv2_kernel,
        grid=grid,
        in_specs=[band_spec, top_spec, bot_spec,
                  pl.BlockSpec((3, 3 * CmidP, CmidP), lambda n, b: (0, 0, 0)),
                  pl.BlockSpec((1, CmidP), lambda n, b: (0, 0)),
                  pl.BlockSpec((1, CmidP), lambda n, b: (0, 0))],
        out_specs=(pl.BlockSpec((TM, CmidP), row_idx),
                   pl.BlockSpec((1, 2, CmidP), st_idx)),
        out_shape=(jax.ShapeDtypeStruct((M, CmidP), jnp.bfloat16),
                   jax.ShapeDtypeStruct((nt, 2, CmidP), jnp.float32)),
        scratch_shapes=[pltpu.VMEM((TH + 2, W, 3 * CmidP), jnp.bfloat16)],
        compiler_params=_COMPILER_PARAMS,
        cost_estimate=_cost(2 * M * 9 * CmidP * CmidP, 2 * M * CmidP * 2),
    )(h1_nhwc, h1_nhwc, h1_nhwc, w2cat, s1, t1)
    s2, t2 = _bn_scale_shift(st2, count, g2, b2)

    # ---- K3: BN2+ReLU -> conv3 (1x1 expansion) + BN3 partial stats ----
    h3, st3 = pl.pallas_call(
        conv3_kernel,
        grid=grid,
        in_specs=[pl.BlockSpec((TM, CmidP), row_idx),
                  pl.BlockSpec((1, CmidP), lambda n, b: (0, 0)),
                  pl.BlockSpec((1, CmidP), lambda n, b: (0, 0)),
                  pl.BlockSpec((CmidP, CoutP), lambda n, b: (0, 0))],
        out_specs=(pl.BlockSpec((TM, CoutP), row_idx),
                   pl.BlockSpec((1, 2, CoutP), st_idx)),
        out_shape=(jax.ShapeDtypeStruct((M, CoutP), jnp.bfloat16),
                   jax.ShapeDtypeStruct((nt, 2, CoutP), jnp.float32)),
        compiler_params=_COMPILER_PARAMS,
        cost_estimate=_cost(2 * M * CmidP * CoutP, M * (CmidP + CoutP) * 2),
    )(h2, s2, t2, w3)
    s3, t3 = _bn_scale_shift(st3, count, g3, b3)

    # ---- K4: BN3 + residual add + final ReLU ----
    out = pl.pallas_call(
        residual_kernel,
        grid=grid,
        in_specs=[pl.BlockSpec((TM, CoutP), row_idx),
                  pl.BlockSpec((TM, CoutP), row_idx),
                  pl.BlockSpec((1, CoutP), lambda n, b: (0, 0)),
                  pl.BlockSpec((1, CoutP), lambda n, b: (0, 0))],
        out_specs=pl.BlockSpec((TM, CoutP), row_idx),
        out_shape=jax.ShapeDtypeStruct((M, CoutP), jnp.float32),
        compiler_params=_COMPILER_PARAMS,
        cost_estimate=_cost(3 * M * CoutP, M * CoutP * (2 + 2 + 4)),
    )(h3, x_pad, s3, t3)

    # glue: strip channel padding, back to NCHW
    return jnp.transpose(out[:, :Cout].reshape(N, H, W, Cout), (0, 3, 1, 2))


# ---------------- pure-JAX reference (for correctness check) ----------------

def reference_forward(x_nchw, w1, w2, w3):
    x = jnp.transpose(x_nchw, (0, 2, 3, 1)).astype(jnp.float32)  # NHWC

    def bn(h):  # gamma=1, beta=0, training-mode batch stats, biased variance
        mean = jnp.mean(h, axis=(0, 1, 2), keepdims=True)
        var = jnp.mean(jnp.square(h - mean), axis=(0, 1, 2), keepdims=True)
        return (h - mean) / jnp.sqrt(var + EPS)

    h = jnp.einsum("nhwc,cd->nhwd", x, w1)
    h = jax.nn.relu(bn(h))
    h = lax.conv_general_dilated(h, w2, window_strides=(1, 1),
                                 padding=((1, 1), (1, 1)),
                                 dimension_numbers=("NHWC", "HWIO", "NHWC"))
    h = jax.nn.relu(bn(h))
    h = jnp.einsum("nhwc,cd->nhwd", h, w3)
    h = bn(h)
    return jnp.transpose(jax.nn.relu(h + x), (0, 3, 1, 2))


if __name__ == "__main__":
    key = jax.random.PRNGKey(0)
    N, H, W = 2, 16, 16
    out_channel = 4
    expansion = 4
    in_channel = out_channel * expansion   # = 16 so the residual add is valid

    k0, k1, k2, k3 = jax.random.split(key, 4)
    x = jax.random.normal(k0, (N, in_channel, H, W), jnp.float32)  # NCHW like PyTorch

    # conv weights random, BN gamma=1 / beta=0 (PyTorch init)
    w1 = jax.random.normal(k1, (in_channel, out_channel), jnp.float32) * 0.1
    w2 = jax.random.normal(k2, (3, 3, out_channel, out_channel), jnp.float32) * 0.1  # HWIO
    w3 = jax.random.normal(k3, (out_channel, out_channel * expansion), jnp.float32) * 0.1

    params = dict(
        w1=w1, w2=w2, w3=w3,
        g1=jnp.ones((out_channel,), jnp.float32),
        b1=jnp.zeros((out_channel,), jnp.float32),
        g2=jnp.ones((out_channel,), jnp.float32),
        b2=jnp.zeros((out_channel,), jnp.float32),
        g3=jnp.ones((out_channel * expansion,), jnp.float32),
        b3=jnp.zeros((out_channel * expansion,), jnp.float32),
    )

    # band_rows_target=128 -> TH=8, 2 row bands per image, so the inter-band
    # halo path is actually exercised (real sizes use the 2048-row default).
    out = jax.block_until_ready(bottleneck_forward(x, params, band_rows_target=128))
    assert out.shape == (N, in_channel, H, W)

    ref = jax.block_until_ready(reference_forward(x, w1, w2, w3))
    max_err = float(jnp.max(jnp.abs(out - ref)))
    mean_err = float(jnp.mean(jnp.abs(out - ref)))
    # bf16 MXU inputs + bf16 intermediates/residual vs an all-f32 reference
    if max_err < 1.5e-1 and mean_err < 2e-2:
        print("KERNEL_OK")
    else:
        print(f"MISMATCH max_abs_err={max_err} mean_abs_err={mean_err}")
</pallas_src>

<mosaic_0001>
module attributes {stable_mosaic.version = 11 : i64} {
  func.func @conv1_kernel(%arg0: i32, %arg1: i32, %arg2: memref<128x128xbf16, #tpu.memory_space<vmem>>, %arg3: memref<128x128xbf16, #tpu.memory_space<vmem>>, %arg4: memref<128x128xbf16, #tpu.memory_space<vmem>>, %arg5: memref<1x2x128xf32, #tpu.memory_space<vmem>>) attributes {dimension_semantics = [#tpu.dimension_semantics<parallel>, #tpu.dimension_semantics<parallel>], iteration_bounds = array<i64: 2, 2>, scalar_prefetch = 0 : i64, scratch_operands = 0 : i64, tpu.core_type = #tpu.core_type<tc>, window_params = [{transform_indices = @transform_0, window_bounds = array<i64: 128, 128>}, {pipeline_mode = #tpu.pipeline_mode<synchronous>, transform_indices = @transform_1, window_bounds = array<i64: 128, 128>}, {transform_indices = @transform_2, window_bounds = array<i64: 128, 128>}, {transform_indices = @transform_3, window_bounds = array<i64: 1, 2, 128>}]} {
    %c0 = arith.constant 0 : index
    %c0_0 = arith.constant 0 : index
    %0 = vector.load %arg2[%c0, %c0_0] : memref<128x128xbf16, #tpu.memory_space<vmem>>, vector<128x128xbf16>
    %c0_1 = arith.constant 0 : index
    %c0_2 = arith.constant 0 : index
    %1 = vector.load %arg3[%c0_1, %c0_2] : memref<128x128xbf16, #tpu.memory_space<vmem>>, vector<128x128xbf16>
    %cst = arith.constant dense<0.000000e+00> : vector<128x128xf32>
    %2 = tpu.matmul %0, %1, %cst {dimension_numbers = #tpu.dot_dimension_numbers<[1], [0], [0], [1], [0, 0, 1, 1], [], []>} : vector<128x128xbf16>, vector<128x128xbf16>, vector<128x128xf32> -> vector<128x128xf32>
    %3 = arith.truncf %2 : vector<128x128xf32> to vector<128x128xbf16>
    %c0_3 = arith.constant 0 : index
    %c0_4 = arith.constant 0 : index
    %4 = vector.load %arg4[%c0_3, %c0_4] : memref<128x128xbf16, #tpu.memory_space<vmem>>, vector<128x128xbf16>
    tpu.vector_store %arg4[%c0_3, %c0_4], %3 {strides = array<i32>} : memref<128x128xbf16, #tpu.memory_space<vmem>>, vector<128x128xbf16>,
    %cst_5 = arith.constant dense<0.000000e+00> : vector<128xf32>
    %5 = vector.multi_reduction <add>, %2, %cst_5 [0] : vector<128x128xf32> to vector<128xf32>
    %6 = vector.shape_cast %5 : vector<128xf32> to vector<1x128xf32>
    %7 = arith.mulf %2, %2 : vector<128x128xf32>
    %cst_6 = arith.constant dense<0.000000e+00> : vector<128xf32>
    %8 = vector.multi_reduction <add>, %7, %cst_6 [0] : vector<128x128xf32> to vector<128xf32>
    %9 = vector.shape_cast %8 : vector<128xf32> to vector<1x128xf32>
    %10 = tpu.concatenate %6, %9 in 0 : vector<1x128xf32>, vector<1x128xf32> -> vector<2x128xf32>
    %c0_7 = arith.constant 0 : index
    %c0_8 = arith.constant 0 : index
    %c0_9 = arith.constant 0 : index
    %11 = vector.load %arg5[%c0_7, %c0_8, %c0_9] : memref<1x2x128xf32, #tpu.memory_space<vmem>>, vector<1x2x128xf32>
    %12 = vector.shape_cast %11 : vector<1x2x128xf32> to vector<2x128xf32>
    %13 = vector.shape_cast %10 : vector<2x128xf32> to vector<1x2x128xf32>
    tpu.vector_store %arg5[%c0_7, %c0_8, %c0_9], %13 {strides = array<i32>} : memref<1x2x128xf32, #tpu.memory_space<vmem>>, vector<1x2x128xf32>,
    return
  }
  func.func @transform_0(%arg0: i32, %arg1: i32) -> (i32, i32) {
    %c2_i32 = arith.constant 2 : i32
    %0 = arith.muli %arg0, %c2_i32 : i32
    %1 = arith.addi %0, %arg1 : i32
    %c0_i32 = arith.constant 0 : i32
    %c0_i32_0 = arith.constant 0 : i32
    return %1, %c0_i32 : i32, i32
  }
  func.func @transform_1(%arg0: i32, %arg1: i32) -> (i32, i32) {
    %c0_i32 = arith.constant 0 : i32
    %c0_i32_0 = arith.constant 0 : i32
    %c0_i32_1 = arith.constant 0 : i32
    return %c0_i32, %c0_i32_0 : i32, i32
  }
  func.func @transform_2(%arg0: i32, %arg1: i32) -> (i32, i32) {
    %c2_i32 = arith.constant 2 : i32
    %0 = arith.muli %arg0, %c2_i32 : i32
    %1 = arith.addi %0, %arg1 : i32
    %c0_i32 = arith.constant 0 : i32
    %c0_i32_0 = arith.constant 0 : i32
    return %1, %c0_i32 : i32, i32
  }
  func.func @transform_3(%arg0: i32, %arg1: i32) -> (i32, i32, i32) {
    %c2_i32 = arith.constant 2 : i32
    %0 = arith.muli %arg0, %c2_i32 : i32
    %1 = arith.addi %0, %arg1 : i32
    %c0_i32 = arith.constant 0 : i32
    %c0_i32_0 = arith.constant 0 : i32
    %c0_i32_1 = arith.constant 0 : i32
    return %1, %c0_i32, %c0_i32_0 : i32, i32, i32
  }
}

</mosaic_0001>

<llo_original>
// kernel: tpu_custom_call.1
$region0: #{tpu_custom_call.1}
  #allocation0 [shape = 'u32[]', space=smem, size = 0x4, offset = 0x4, fixed_abs, tag = 'smem constant byte address 0x4 - core index']
  #allocation1 [shape = 'u32[144,128]{1,0:T(1,128)}', space=vmem, size = 0x12000, scoped, tag = 'internal scratch']
  %s0 = inlined_call_operand.hbm [shape: bf16[512,128], index: 0, kind: input, shape index: {}]
  %s1 = inlined_call_operand.hbm [shape: bf16[128,128], index: 1, kind: input, shape index: {}]
  %s2 = inlined_call_operand.hbm [shape: bf16[512,128], index: 2, kind: output, shape index: {0}]
  %s3 = inlined_call_operand.hbm [shape: f32[4,2,128], index: 3, kind: output, shape index: {1}]
  %4 = xla_tuple %s2, %s3
  %s5 = sld [smem:[#allocation0]]
  $region57: #{tpu_custom_call.1} parent=0
    _
  %s7 = ssub.s32 1, %s5
  %s8 = scalar_select 0, %s7, %s5
  $region1: #{tpu_custom_call.1} parent=0
    #allocation2 [shape = 'u8[65536]{0}', space=vmem, size = 0x10000, scoped, tag = 'input window, operand 0']
    #allocation3 [shape = 's32[2]{0}', space=sflag, size = 0x8, scoped, tag = 'scoped memory for tpu_custom_call.1']
    #allocation4 [shape = 's32[2]{0}', space=sflag, size = 0x8, scoped, tag = 'scoped memory for tpu_custom_call.1']
    #allocation5 [shape = 'u8[32768]{0}', space=vmem, size = 0x8000, scoped, tag = 'input window, operand 1, single buffered']
    #allocation6 [shape = 's32[1]{0}', space=sflag, size = 0x4, scoped, tag = 'scoped memory for tpu_custom_call.1']
    #allocation7 [shape = 'u8[65536]{0}', space=vmem, size = 0x10000, scoped, tag = 'output window, operand 0']
    #allocation8 [shape = 'u8[2048]{0}', space=vmem, size = 0x800, scoped, tag = 'output window, operand 1']
    #allocation9 [shape = 's32[2]{0}', space=sflag, size = 0x8, scoped, tag = 'scoped memory for tpu_custom_call.1']
    %9 = vsyncpa [#allocation3], 0
    %s10 = scalar_lea.sflag [#allocation3], 1
    %11 = vsyncpa %s10, 0
    %12 = vsyncpa [#allocation6], 0
    %13 = vsyncpa [#allocation4], 0
    %s14 = scalar_lea.sflag [#allocation4], 1
    %15 = vsyncpa %s14, 0
    %16 = vsyncpa [#allocation9], 0
    %s17 = scalar_lea.sflag [#allocation9], 1
    %18 = vsyncpa %s17, 0
    loop: start=0, step=1, limit=6
    $region2: #{tpu_custom_call.1} parent=1 // loop_pre_header
      _
    $region3: #{tpu_custom_call.1} parent=1 // loop_header
      %s20 = sphi 0, %s24
      %p21 = scmp.ge.s32.totalorder %s20, 6
      %s27 = sphi 0, %s39
      %s28 = sphi 0, %s35
      %s29 = sphi 0, %s27
      %s30 = sphi 0, %s28
      %s31 = sphi 0, %s29
      %s32 = sphi 0, %s30
      %s46 = sphi 0, %s48
      %s49 = sphi 0, %s46
      %s50 = sphi 0, %s49
      %s66 = sphi 0, %s50
      %s70 = sphi 0, %s70
      %s72 = sphi 0, %s70
      %s73 = sphi 0, %s72
      %s87 = sphi 0, %s73
      %s97 = sphi 0, %s99
      %s100 = sphi 0, %s97
      %s101 = sphi 0, %s100
      %s117 = sphi 0, %s101
      %s127 = sphi 0, %s129
      %s130 = sphi 0, %s127
      %s131 = sphi 0, %s130
      %s147 = sphi 0, %s131
    $region4: #{tpu_custom_call.1} parent=1 // loop_header_branch
      %23 = sbr.rel (%p21) target = $region8
    $region5: #{tpu_custom_call.1} parent=1 // loop_body
      %s25 = ssub.s32 %s20, 1
      %s26 = ssub.s32 %s20, 2
      %s33 = sadd.s32 1, %s28
      %p34 = scmp.ge.s32.totalorder %s33, 2
      %s35 = scalar_select %p34, 0, %s33
      %s36 = sadd.s32 1, %s27
      %s37 = scalar_select %p34, %s36, %s27
      %p38 = scmp.ge.s32.totalorder %s37, 2
      %s39 = scalar_select %p38, 0, %s37
      %s40 = smul.u32 %s27, 2
      %s41 = sadd.s32 %s40, %s28
      %s42 = smul.u32 %s39, 2
      %s43 = sadd.s32 %s42, %s35
      %s44 = ssub.s32 %s41, %s43
      %p45 = scmp.eq.s32.totalorder %s44, 0
      %s47 = sadd.s32 %s46, 1
      %s48 = scalar_select %p45, %s46, %s47
      %p51 = pneg %p45
      %p52 = scmp.eq.s32.totalorder %s20, 3
      %p53 = por %p51, %p52
      %p54 = scmp.ne.s32.totalorder %s46, %s49
      %p55 = scmp.eq.s32.totalorder %s20, 0
      %p56 = por %p54, %p55
      %p57 = scmp.ne.s32.totalorder %s46, %s49
      %p58 = scmp.eq.s32.totalorder %s25, 3
      %p59 = por %p57, %p58
      %p60 = scmp.ne.s32.totalorder %s49, %s50
      %p61 = scmp.eq.s32.totalorder %s25, 0
      %p62 = por %p60, %p61
      %p63 = scmp.ne.s32.totalorder %s49, %s50
      %p64 = scmp.eq.s32.totalorder %s26, 3
      %p65 = por %p63, %p64
      %p67 = scmp.ne.s32.totalorder %s50, %s66
      %p68 = scmp.eq.s32.totalorder %s26, 0
      %p69 = por %p67, %p68
      %s71 = sadd.s32 %s70, 1
      %p74 = scmp.eq.s32.totalorder %s20, 3
      %p75 = scmp.ne.s32.totalorder %s70, %s72
      %p76 = scmp.eq.s32.totalorder %s20, 0
      %p77 = por %p75, %p76
      %p78 = scmp.ne.s32.totalorder %s70, %s72
      %p79 = scmp.eq.s32.totalorder %s25, 3
      %p80 = por %p78, %p79
      %p81 = scmp.ne.s32.totalorder %s72, %s73
      %p82 = scmp.eq.s32.totalorder %s25, 0
      %p83 = por %p81, %p82
      %p84 = scmp.ne.s32.totalorder %s72, %s73
      %p85 = scmp.eq.s32.totalorder %s26, 3
      %p86 = por %p84, %p85
      %p88 = scmp.ne.s32.totalorder %s73, %s87
      %p89 = scmp.eq.s32.totalorder %s26, 0
      %p90 = por %p88, %p89
      %s91 = smul.u32 %s27, 2
      %s92 = sadd.s32 %s91, %s28
      %s93 = smul.u32 %s39, 2
      %s94 = sadd.s32 %s93, %s35
      %s95 = ssub.s32 %s92, %s94
      %p96 = scmp.eq.s32.totalorder %s95, 0
      %s98 = sadd.s32 %s97, 1
      %s99 = scalar_select %p96, %s97, %s98
      %p102 = pneg %p96
      %p103 = scmp.eq.s32.totalorder %s20, 3
      %p104 = por %p102, %p103
      %p105 = scmp.ne.s32.totalorder %s97, %s100
      %p106 = scmp.eq.s32.totalorder %s20, 0
      %p107 = por %p105, %p106
      %p108 = scmp.ne.s32.totalorder %s97, %s100
      %p109 = scmp.eq.s32.totalorder %s25, 3
      %p110 = por %p108, %p109
      %p111 = scmp.ne.s32.totalorder %s100, %s101
      %p112 = scmp.eq.s32.totalorder %s25, 0
      %p113 = por %p111, %p112
      %p114 = scmp.ne.s32.totalorder %s100, %s101
      %p115 = scmp.eq.s32.totalorder %s26, 3
      %p116 = por %p114, %p115
      %p118 = scmp.ne.s32.totalorder %s101, %s117
      %p119 = scmp.eq.s32.totalorder %s26, 0
      %p120 = por %p118, %p119
      %s121 = smul.u32 %s27, 2
      %s122 = sadd.s32 %s121, %s28
      %s123 = smul.u32 %s39, 2
      %s124 = sadd.s32 %s123, %s35
      %s125 = ssub.s32 %s122, %s124
      %p126 = scmp.eq.s32.totalorder %s125, 0
      %s128 = sadd.s32 %s127, 1
      %s129 = scalar_select %p126, %s127, %s128
      %p132 = pneg %p126
      %p133 = scmp.eq.s32.totalorder %s20, 3
      %p134 = por %p132, %p133
      %p135 = scmp.ne.s32.totalorder %s127, %s130
      %p136 = scmp.eq.s32.totalorder %s20, 0
      %p137 = por %p135, %p136
      %p138 = scmp.ne.s32.totalorder %s127, %s130
      %p139 = scmp.eq.s32.totalorder %s25, 3
      %p140 = por %p138, %p139
      %p141 = scmp.ne.s32.totalorder %s130, %s131
      %p142 = scmp.eq.s32.totalorder %s25, 0
      %p143 = por %p141, %p142
      %p144 = scmp.ne.s32.totalorder %s130, %s131
      %p145 = scmp.eq.s32.totalorder %s26, 3
      %p146 = por %p144, %p145
      %p148 = scmp.ne.s32.totalorder %s131, %s147
      %p149 = scmp.eq.s32.totalorder %s26, 0
      %p150 = por %p148, %p149
      %p151 = scmp.le.s32.totalorder 1, %s20
      %p152 = scmp.lt.s32.totalorder %s20, 5
      %p153 = pnand %p151, %p152
      %p154 = pneg %p153
      // Predicated region
      $region9: #{tpu_custom_call.1} parent=5 // pred_check
        _
      $region10: #{tpu_custom_call.1} parent=5 // pred_check_branch
        %156 = sbr.rel (%p153) target = $region12
      $region11: #{tpu_custom_call.1} parent=5 // pred_region
        %s157 = ssub.s32 %s20, 1
        // Predicated region
        $region13: #{tpu_custom_call.1} parent=11 // pred_check
          %p158 = pneg %p83
        $region14: #{tpu_custom_call.1} parent=11 // pred_check_branch
          %160 = sbr.rel (%p158) target = $region16
        $region15: #{tpu_custom_call.1} parent=11 // pred_region
          %s162 = ssub.s32 1024, 1024
          %163 = vsyncadd [#allocation6], %s162
          %s164 = sshll.u32 [#allocation5], 4
          %s165 = int_to_ptr.vmem [resolvable:$true] %s164
          %170 = dma.hbm_to_vmem [thread:$0]  %s1, 1024, %s165, [#allocation6], 64, 64, 4
        $region16: #{tpu_custom_call.1} parent=11 // pred_fallthru
          _
      $region12: #{tpu_custom_call.1} parent=5 // pred_fallthru
        _
      %p171 = scmp.lt.s32.totalorder %s20, 4
      // Predicated region
      $region17: #{tpu_custom_call.1} parent=5 // pred_check
        %p172 = pneg %p171
      $region18: #{tpu_custom_call.1} parent=5 // pred_check_branch
        %174 = sbr.rel (%p172) target = $region20
      $region19: #{tpu_custom_call.1} parent=5 // pred_region
        // Predicated region
        $region21: #{tpu_custom_call.1} parent=19 // pred_check
          %p175 = pneg %p56
        $region22: #{tpu_custom_call.1} parent=19 // pred_check_branch
          %177 = sbr.rel (%p175) target = $region24
        $region23: #{tpu_custom_call.1} parent=19 // pred_region
          %s178 = sand.u32 %s46, 1
          %s179 = scalar_lea.sflag [#allocation3], %s178
          %s180 = sand.u32 %s46, 1
          %s181 = smul.addr %s180, 64
          %s182 = scalar_lea.vmem [#allocation2], %s181
          %s183 = smul.u32 %s27, 2
          %s184 = sadd.s32 %s183, %s28
          %s185 = smul.u32 16, %s184
          %s187 = ssub.s32 1024, 1024
          %188 = vsyncadd %s179, %s187
          %s189 = smul.addr %s185, 64
          %s190 = scalar_lea.hbm %s0, %s189
          %s191 = sshll.u32 %s182, 4
          %s192 = int_to_ptr.vmem [resolvable:$true] %s191
          %197 = dma.hbm_to_vmem [thread:$0]  %s190, 1024, %s192, %s179, 64, 64, 4
        $region24: #{tpu_custom_call.1} parent=19 // pred_fallthru
          _
      $region20: #{tpu_custom_call.1} parent=5 // pred_fallthru
        _
      %p198 = scmp.le.s32.totalorder 1, %s20
      %p199 = scmp.lt.s32.totalorder %s20, 5
      %p200 = pnand %p198, %p199
      %p201 = pneg %p200
      // Predicated region
      $region25: #{tpu_custom_call.1} parent=5 // pred_check
        _
      $region26: #{tpu_custom_call.1} parent=5 // pred_check_branch
        %203 = sbr.rel (%p200) target = $region28
      $region27: #{tpu_custom_call.1} parent=5 // pred_region
        %s204 = ssub.s32 %s20, 1
        %s205 = sand.u32 %s49, 1
        %s206 = scalar_lea.sflag [#allocation3], %s205
        %s207 = sand.u32 %s49, 1
        %s208 = smul.addr %s207, 64
        %s209 = scalar_lea.vmem [#allocation2], %s208
        // Predicated region
        $region29: #{tpu_custom_call.1} parent=27 // pred_check
          %p210 = pneg %p62
        $region30: #{tpu_custom_call.1} parent=27 // pred_check_branch
          %212 = sbr.rel (%p210) target = $region32
        $region31: #{tpu_custom_call.1} parent=27 // pred_region
          %213 = dma.done %s206, 1024
        $region32: #{tpu_custom_call.1} parent=27 // pred_fallthru
          _
        // Predicated region
        $region33: #{tpu_custom_call.1} parent=27 // pred_check
          %p214 = pneg %p83
        $region34: #{tpu_custom_call.1} parent=27 // pred_check_branch
          %216 = sbr.rel (%p214) target = $region36
        $region35: #{tpu_custom_call.1} parent=27 // pred_region
          %217 = dma.done [#allocation6], 1024
        $region36: #{tpu_custom_call.1} parent=27 // pred_fallthru
          _
        %s218 = sand.u32 %s49, 1
        %s219 = scalar_lea.sflag [#allocation3], %s218
        %s220 = sand.u32 %s49, 1
        %s221 = smul.addr %s220, 64
        %s222 = scalar_lea.vmem [#allocation2], %s221
        %p223 = pneg %p62
        %p224 = pneg %p59
        %p225 = pneg %p83
        %p226 = pneg %p80
        %p227 = pneg %p113
        %p228 = pneg %p110
        %s229 = sand.u32 %s100, 1
        %s230 = scalar_lea.sflag [#allocation4], %s229
        %s231 = sand.u32 %s100, 1
        %s232 = smul.addr %s231, 64
        %s233 = scalar_lea.vmem [#allocation7], %s232
        %p234 = pneg %p143
        %p235 = pneg %p140
        %s236 = sand.u32 %s130, 1
        %s237 = scalar_lea.sflag [#allocation9], %s236
        %s238 = sand.u32 %s130, 1
        %s239 = smul.addr %s238, 2
        %s240 = scalar_lea.vmem [#allocation8], %s239
        %s241 = smul.u32 %s29, 2
        %s242 = sadd.s32 %s241, %s30
        %s243 = smul.u32 16, %s242
        %s244 = smul.u32 %s29, 2
        %s245 = sadd.s32 %s244, %s30
        %s246 = smul.u32 16, %s245
        %s247 = smul.u32 %s29, 2
        %s248 = sadd.s32 %s247, %s30
        %v250 = vld [vmem:[%s209] sm:$0xf]
        %v251 = vld [vmem:[%s209 + $0x4] sm:$0xf]
        %v252 = vld [vmem:[%s209 + $0x8] sm:$0xf]
        %v253 = vld [vmem:[%s209 + $0xc] sm:$0xf]
        %v254 = vld [vmem:[%s209 + $0x10] sm:$0xf]
        %v255 = vld [vmem:[%s209 + $0x14] sm:$0xf]
        %v256 = vld [vmem:[%s209 + $0x18] sm:$0xf]
        %v257 = vld [vmem:[%s209 + $0x1c] sm:$0xf]
        %v258 = vld [vmem:[%s209 + $0x20] sm:$0xf]
        %v259 = vld [vmem:[%s209 + $0x24] sm:$0xf]
        %v260 = vld [vmem:[%s209 + $0x28] sm:$0xf]
        %v261 = vld [vmem:[%s209 + $0x2c] sm:$0xf]
        %v262 = vld [vmem:[%s209 + $0x30] sm:$0xf]
        %v263 = vld [vmem:[%s209 + $0x34] sm:$0xf]
        %v264 = vld [vmem:[%s209 + $0x38] sm:$0xf]
        %v265 = vld [vmem:[%s209 + $0x3c] sm:$0xf]
        %v266 = vld [vmem:[#allocation5] sm:$0xf]
        %v267 = vld [vmem:[#allocation5 + $0x4] sm:$0xf]
        %v268 = vld [vmem:[#allocation5 + $0x8] sm:$0xf]
        %v269 = vld [vmem:[#allocation5 + $0xc] sm:$0xf]
        %v270 = vld [vmem:[#allocation5 + $0x10] sm:$0xf]
        %v271 = vld [vmem:[#allocation5 + $0x14] sm:$0xf]
        %v272 = vld [vmem:[#allocation5 + $0x18] sm:$0xf]
        %v273 = vld [vmem:[#allocation5 + $0x1c] sm:$0xf]
        %v274 = vld [vmem:[#allocation5 + $0x20] sm:$0xf]
        %v275 = vld [vmem:[#allocation5 + $0x24] sm:$0xf]
        %v276 = vld [vmem:[#allocation5 + $0x28] sm:$0xf]
        %v277 = vld [vmem:[#allocation5 + $0x2c] sm:$0xf]
        %v278 = vld [vmem:[#allocation5 + $0x30] sm:$0xf]
        %v279 = vld [vmem:[#allocation5 + $0x34] sm:$0xf]
        %v280 = vld [vmem:[#allocation5 + $0x38] sm:$0xf]
        %v281 = vld [vmem:[#allocation5 + $0x3c] sm:$0xf]
        %v298 = vunpack.c.l.b16 %v250
        %v299 = vunpack.c.l.b16 %v251
        %v300 = vunpack.c.l.b16 %v252
        %v301 = vunpack.c.l.b16 %v253
        %v302 = vunpack.c.l.b16 %v254
        %v303 = vunpack.c.l.b16 %v255
        %v304 = vunpack.c.l.b16 %v256
        %v305 = vunpack.c.l.b16 %v257
        %v306 = vunpack.c.l.b16 %v258
        %v307 = vunpack.c.l.b16 %v259
        %v308 = vunpack.c.l.b16 %v260
        %v309 = vunpack.c.l.b16 %v261
        %v310 = vunpack.c.l.b16 %v262
        %v311 = vunpack.c.l.b16 %v263
        %v312 = vunpack.c.l.b16 %v264
        %v313 = vunpack.c.l.b16 %v265
        %v314 = vpack.c.b16 %v299, %v298
        %v315 = vpack.c.b16 %v301, %v300
        %v316 = vpack.c.b16 %v303, %v302
        %v317 = vpack.c.b16 %v305, %v304
        %v318 = vpack.c.b16 %v307, %v306
        %v319 = vpack.c.b16 %v309, %v308
        %v320 = vpack.c.b16 %v311, %v310
        %v321 = vpack.c.b16 %v313, %v312
        %v346 = vunpack.c.l.b16 %v266
        %v347 = vunpack.c.l.b16 %v267
        %v348 = vunpack.c.l.b16 %v268
        %v349 = vunpack.c.l.b16 %v269
        %v350 = vunpack.c.l.b16 %v270
        %v351 = vunpack.c.l.b16 %v271
        %v352 = vunpack.c.l.b16 %v272
        %v353 = vunpack.c.l.b16 %v273
        %v354 = vunpack.c.l.b16 %v274
        %v355 = vunpack.c.l.b16 %v275
        %v356 = vunpack.c.l.b16 %v276
        %v357 = vunpack.c.l.b16 %v277
        %v358 = vunpack.c.l.b16 %v278
        %v359 = vunpack.c.l.b16 %v279
        %v360 = vunpack.c.l.b16 %v280
        %v361 = vunpack.c.l.b16 %v281
        %v362 = vpack.c.b16 %v347, %v346
        %v363 = vpack.c.b16 %v349, %v348
        %v364 = vpack.c.b16 %v351, %v350
        %v365 = vpack.c.b16 %v353, %v352
        %v366 = vpack.c.b16 %v355, %v354
        %v367 = vpack.c.b16 %v357, %v356
        %v368 = vpack.c.b16 %v359, %v358
        %v369 = vpack.c.b16 %v361, %v360
        %378 = vmatprep.subr.bf16.mxu0 0
        %379 = vmatpush1.bf16.msra.mxu0 %v362
        %380 = vmatprep.subr.bf16.mxu0 0
        %381 = vmatpush1.bf16.msra.mxu0 %v363
        %382 = vmatprep.subr.bf16.mxu0 0
        %383 = vmatpush1.bf16.msra.mxu0 %v364
        %384 = vmatprep.subr.bf16.mxu0 0
        %385 = vmatpush1.bf16.msra.mxu0 %v365
        %386 = vmatprep.subr.bf16.mxu0 0
        %387 = vmatpush1.bf16.msra.mxu0 %v366
        %388 = vmatprep.subr.bf16.mxu0 0
        %389 = vmatpush1.bf16.msra.mxu0 %v367
        %390 = vmatprep.subr.bf16.mxu0 0
        %391 = vmatpush1.bf16.msra.mxu0 %v368
        %392 = vmatprep.subr.bf16.mxu0 0
        %393 = vmatpush1.bf16.msra.mxu0 %v369
        %394 = vmatprep.subr.bf16.mxu0 0
        %395 = vmatpush1.bf16.msra.mxu0 0
        %396 = vmatprep.subr.bf16.mxu0 0
        %397 = vmatpush1.bf16.msra.mxu0 0
        %398 = vmatprep.subr.bf16.mxu0 0
        %399 = vmatpush1.bf16.msra.mxu0 0
        %400 = vmatprep.subr.bf16.mxu0 0
        %401 = vmatpush1.bf16.msra.mxu0 0
        %402 = vmatprep.subr.bf16.mxu0 0
        %403 = vmatpush1.bf16.msra.mxu0 0
        %404 = vmatprep.subr.bf16.mxu0 0
        %405 = vmatpush1.bf16.msra.mxu0 0
        %406 = vmatprep.subr.bf16.mxu0 0
        %407 = vmatpush1.bf16.msra.mxu0 0
        %408 = vmatprep.subr.bf16.mxu0 0
        %409 = vmatpush1.bf16.msra.mxu0 0
        %410 = vmatprep.mubr.bf16.mxu0 0
        %411 = vmatmul.mubr.bf16.gmra.mrb[0].mxu0 %v314
        %v412 = vpop.f32.mrb[0].mxu0
        %v413 = vadd.f32 0.0, %v412
        %v414 = vpop.f32.mrb[0].mxu0
        %v415 = vpop.f32.mrb[0].mxu0
        %v416 = vadd.f32 0.0, %v415
        %v417 = vpop.f32.mrb[0].mxu0
        %418 = vmatprep.mubr.bf16.mxu0 0
        %419 = vmatmul.mubr.bf16.gmra.mrb[0].mxu0 %v315
        %v420 = vpop.f32.mrb[0].mxu0
        %v421 = vadd.f32 0.0, %v420
        %v422 = vpop.f32.mrb[0].mxu0
        %v423 = vpop.f32.mrb[0].mxu0
        %v424 = vadd.f32 0.0, %v423
        %v425 = vpop.f32.mrb[0].mxu0
        %426 = vmatprep.mubr.bf16.mxu0 0
        %427 = vmatmul.mubr.bf16.gmra.mrb[0].mxu0 %v316
        %v428 = vpop.f32.mrb[0].mxu0
        %v429 = vadd.f32 0.0, %v428
        %v430 = vpop.f32.mrb[0].mxu0
        %v431 = vpop.f32.mrb[0].mxu0
        %v432 = vadd.f32 0.0, %v431
        %v433 = vpop.f32.mrb[0].mxu0
        %434 = vmatprep.mubr.bf16.mxu0 0
        %435 = vmatmul.mubr.bf16.gmra.mrb[0].mxu0 %v317
        %v436 = vpop.f32.mrb[0].mxu0
        %v437 = vadd.f32 0.0, %v436
        %v438 = vpop.f32.mrb[0].mxu0
        %v439 = vpop.f32.mrb[0].mxu0
        %v440 = vadd.f32 0.0, %v439
        %v441 = vpop.f32.mrb[0].mxu0
        %442 = vmatprep.mubr.bf16.mxu0 0
        %443 = vmatmul.mubr.bf16.gmra.mrb[0].mxu0 %v318
        %v444 = vpop.f32.mrb[0].mxu0
        %v445 = vadd.f32 0.0, %v444
        %v446 = vpop.f32.mrb[0].mxu0
        %v447 = vpop.f32.mrb[0].mxu0
        %v448 = vadd.f32 0.0, %v447
        %v449 = vpop.f32.mrb[0].mxu0
        %450 = vmatprep.mubr.bf16.mxu0 0
        %451 = vmatmul.mubr.bf16.gmra.mrb[0].mxu0 %v319
        %v452 = vpop.f32.mrb[0].mxu0
        %v453 = vadd.f32 0.0, %v452
        %v454 = vpop.f32.mrb[0].mxu0
        %v455 = vpop.f32.mrb[0].mxu0
        %v456 = vadd.f32 0.0, %v455
        %v457 = vpop.f32.mrb[0].mxu0
        %458 = vmatprep.mubr.bf16.mxu0 0
        %459 = vmatmul.mubr.bf16.gmra.mrb[0].mxu0 %v320
        %v460 = vpop.f32.mrb[0].mxu0
        %v461 = vadd.f32 0.0, %v460
        %v462 = vpop.f32.mrb[0].mxu0
        %v463 = vpop.f32.mrb[0].mxu0
        %v464 = vadd.f32 0.0, %v463
        %v465 = vpop.f32.mrb[0].mxu0
        %466 = vmatprep.mubr.bf16.mxu0 0
        %467 = vmatmul.mubr.bf16.gmra.mrb[0].mxu0 %v321
        %v468 = vpop.f32.mrb[0].mxu0
        %v469 = vadd.f32 0.0, %v468
        %v470 = vpop.f32.mrb[0].mxu0
        %v471 = vpop.f32.mrb[0].mxu0
        %v472 = vadd.f32 0.0, %v471
        %v473 = vpop.f32.mrb[0].mxu0
        %474 = vdwg.mxu0
        %v475 = vpack.c.bf16 %v416, %v413
        %v476 = vpack.c.bf16 %v424, %v421
        %v477 = vpack.c.bf16 %v432, %v429
        %v478 = vpack.c.bf16 %v440, %v437
        %v479 = vpack.c.bf16 %v448, %v445
        %v480 = vpack.c.bf16 %v456, %v453
        %v481 = vpack.c.bf16 %v464, %v461
        %v482 = vpack.c.bf16 %v472, %v469
        %v491 = vunpack.c.l.b16 %v475
        %v492 = vunpack.c.h.b16 %v475
        %v493 = vunpack.c.l.b16 %v476
        %v494 = vunpack.c.h.b16 %v476
        %v495 = vunpack.c.l.b16 %v477
        %v496 = vunpack.c.h.b16 %v477
        %v497 = vunpack.c.l.b16 %v478
        %v498 = vunpack.c.h.b16 %v478
        %v499 = vunpack.c.l.b16 %v479
        %v500 = vunpack.c.h.b16 %v479
        %v501 = vunpack.c.l.b16 %v480
        %v502 = vunpack.c.h.b16 %v480
        %v503 = vunpack.c.l.b16 %v481
        %v504 = vunpack.c.h.b16 %v481
        %v505 = vunpack.c.l.b16 %v482
        %v506 = vunpack.c.h.b16 %v482
        %v507 = vpack.c.b16 %v491, %v491
        %v508 = vpack.c.b16 %v492, %v492
        %v509 = vpack.c.b16 %v493, %v493
        %v510 = vpack.c.b16 %v494, %v494
        %v511 = vpack.c.b16 %v495, %v495
        %v512 = vpack.c.b16 %v496, %v496
        %v513 = vpack.c.b16 %v497, %v497
        %v514 = vpack.c.b16 %v498, %v498
        %v515 = vpack.c.b16 %v499, %v499
        %v516 = vpack.c.b16 %v500, %v500
        %v517 = vpack.c.b16 %v501, %v501
        %v518 = vpack.c.b16 %v502, %v502
        %v519 = vpack.c.b16 %v503, %v503
        %v520 = vpack.c.b16 %v504, %v504
        %v521 = vpack.c.b16 %v505, %v505
        %v522 = vpack.c.b16 %v506, %v506
        %539 = vst [vmem:[%s233] sm:$0xf] %v507
        %540 = vst [vmem:[%s233 + $0x4] sm:$0xf] %v508
        %541 = vst [vmem:[%s233 + $0x8] sm:$0xf] %v509
        %542 = vst [vmem:[%s233 + $0xc] sm:$0xf] %v510
        %543 = vst [vmem:[%s233 + $0x10] sm:$0xf] %v511
        %544 = vst [vmem:[%s233 + $0x14] sm:$0xf] %v512
        %545 = vst [vmem:[%s233 + $0x18] sm:$0xf] %v513
        %546 = vst [vmem:[%s233 + $0x1c] sm:$0xf] %v514
        %547 = vst [vmem:[%s233 + $0x20] sm:$0xf] %v515
        %548 = vst [vmem:[%s233 + $0x24] sm:$0xf] %v516
        %549 = vst [vmem:[%s233 + $0x28] sm:$0xf] %v517
        %550 = vst [vmem:[%s233 + $0x2c] sm:$0xf] %v518
        %551 = vst [vmem:[%s233 + $0x30] sm:$0xf] %v519
        %552 = vst [vmem:[%s233 + $0x34] sm:$0xf] %v520
        %553 = vst [vmem:[%s233 + $0x38] sm:$0xf] %v521
        %554 = vst [vmem:[%s233 + $0x3c] sm:$0xf] %v522
        %v555 = vadd.f32 %v413, %v416
        %v556 = vadd.f32 %v555, %v421
        %v557 = vadd.f32 %v556, %v424
        %v558 = vadd.f32 %v557, %v429
        %v559 = vadd.f32 %v558, %v432
        %v560 = vadd.f32 %v559, %v437
        %v561 = vadd.f32 %v560, %v440
        %v562 = vadd.f32 %v561, %v445
        %v563 = vadd.f32 %v562, %v448
        %v564 = vadd.f32 %v563, %v453
        %v565 = vadd.f32 %v564, %v456
        %v566 = vadd.f32 %v565, %v461
        %v567 = vadd.f32 %v566, %v464
        %v568 = vadd.f32 %v567, %v469
        %v569 = vadd.f32 %v568, %v472
        %v570 = vrot.slane %v569, 4
        %v571 = vadd.f32 %v569, %v570
        %v572 = vrot.slane %v571, 2
        %v573 = vadd.f32 %v571, %v572
        %v574 = vrot.slane %v573, 1
        %v575 = vadd.f32 %v573, %v574
        %v576 = vmul.f32 %v413, %v413
        %v577 = vmul.f32 %v416, %v416
        %v578 = vmul.f32 %v421, %v421
        %v579 = vmul.f32 %v424, %v424
        %v580 = vmul.f32 %v429, %v429
        %v581 = vmul.f32 %v432, %v432
        %v582 = vmul.f32 %v437, %v437
        %v583 = vmul.f32 %v440, %v440
        %v584 = vmul.f32 %v445, %v445
        %v585 = vmul.f32 %v448, %v448
        %v586 = vmul.f32 %v453, %v453
        %v587 = vmul.f32 %v456, %v456
        %v588 = vmul.f32 %v461, %v461
        %v589 = vmul.f32 %v464, %v464
        %v590 = vmul.f32 %v469, %v469
        %v591 = vmul.f32 %v472, %v472
        %v592 = vadd.f32 %v576, %v577
        %v593 = vadd.f32 %v592, %v578
        %v594 = vadd.f32 %v593, %v579
        %v595 = vadd.f32 %v594, %v580
        %v596 = vadd.f32 %v595, %v581
        %v597 = vadd.f32 %v596, %v582
        %v598 = vadd.f32 %v597, %v583
        %v599 = vadd.f32 %v598, %v584
        %v600 = vadd.f32 %v599, %v585
        %v601 = vadd.f32 %v600, %v586
        %v602 = vadd.f32 %v601, %v587
        %v603 = vadd.f32 %v602, %v588
        %v604 = vadd.f32 %v603, %v589
        %v605 = vadd.f32 %v604, %v590
        %v606 = vadd.f32 %v605, %v591
        %v607 = vrot.slane %v606, 4
        %v608 = vadd.f32 %v606, %v607
        %v609 = vrot.slane %v608, 2
        %v610 = vadd.f32 %v608, %v609
        %v611 = vrot.slane %v610, 1
        %v612 = vadd.f32 %v610, %v611
        %vm613 = vcmask 1040384
        %v614 = vsel %vm613, %v575, %v612
        %615 = vst [vmem:[%s240] sm:$0x3] %v614
        %s616 = sand.u32 %s100, 1
        %s617 = scalar_lea.sflag [#allocation4], %s616
        %s618 = sand.u32 %s100, 1
        %s619 = smul.addr %s618, 64
        %s620 = scalar_lea.vmem [#allocation7], %s619
        %s621 = sand.u32 %s130, 1
        %s622 = scalar_lea.sflag [#allocation9], %s621
        %s623 = sand.u32 %s130, 1
        %s624 = smul.addr %s623, 2
        %s625 = scalar_lea.vmem [#allocation8], %s624
        // Predicated region
        $region37: #{tpu_custom_call.1} parent=27 // pred_check
          %p626 = pneg %p110
        $region38: #{tpu_custom_call.1} parent=27 // pred_check_branch
          %628 = sbr.rel (%p626) target = $region40
        $region39: #{tpu_custom_call.1} parent=27 // pred_region
          %s629 = smul.u32 %s29, 2
          %s630 = sadd.s32 %s629, %s30
          %s631 = smul.u32 16, %s630
          %s633 = ssub.s32 1024, 1024
          %634 = vsyncadd %s617, %s633
          %s635 = smul.addr %s631, 64
          %s636 = scalar_lea.hbm %s2, %s635
          %s637 = sshll.u32 %s620, 4
          %s638 = int_to_ptr.vmem [resolvable:$true] %s637
          %643 = dma.vmem_to_hbm [thread:$0]  %s638, 1024, %s636, %s617, 64, 64, 4
        $region40: #{tpu_custom_call.1} parent=27 // pred_fallthru
          _
        // Predicated region
        $region41: #{tpu_custom_call.1} parent=27 // pred_check
          %p644 = pneg %p140
        $region42: #{tpu_custom_call.1} parent=27 // pred_check_branch
          %646 = sbr.rel (%p644) target = $region44
        $region43: #{tpu_custom_call.1} parent=27 // pred_region
          %s647 = smul.u32 %s29, 2
          %s648 = sadd.s32 %s647, %s30
          %s650 = ssub.s32 32, 32
          %651 = vsyncadd %s622, %s650
          %s652 = smul.addr %s648, 32
          %s653 = scalar_lea.hbm %s3, %s652
          %s655 = sshll.u32 %s625, 4
          %s656 = int_to_ptr.vmem [resolvable:$true] %s655
          %658 = dma.vmem_to_hbm [thread:$0]  %s656, 32, %s653, %s622
        $region44: #{tpu_custom_call.1} parent=27 // pred_fallthru
          _
      $region28: #{tpu_custom_call.1} parent=5 // pred_fallthru
        _
      %p659 = scmp.le.s32.totalorder 2, %s20
      // Predicated region
      $region45: #{tpu_custom_call.1} parent=5 // pred_check
        %p660 = pneg %p659
      $region46: #{tpu_custom_call.1} parent=5 // pred_check_branch
        %662 = sbr.rel (%p660) target = $region48
      $region47: #{tpu_custom_call.1} parent=5 // pred_region
        %s663 = ssub.s32 %s20, 2
        // Predicated region
        $region49: #{tpu_custom_call.1} parent=47 // pred_check
          %p664 = pneg %p116
        $region50: #{tpu_custom_call.1} parent=47 // pred_check_branch
          %666 = sbr.rel (%p664) target = $region52
        $region51: #{tpu_custom_call.1} parent=47 // pred_region
          %s667 = sand.u32 %s101, 1
          %s668 = scalar_lea.sflag [#allocation4], %s667
          %s669 = sand.u32 %s101, 1
          %s670 = smul.addr %s669, 64
          %s671 = scalar_lea.vmem [#allocation7], %s670
          %672 = dma.done %s668, 1024
        $region52: #{tpu_custom_call.1} parent=47 // pred_fallthru
          _
        // Predicated region
        $region53: #{tpu_custom_call.1} parent=47 // pred_check
          %p673 = pneg %p146
        $region54: #{tpu_custom_call.1} parent=47 // pred_check_branch
          %675 = sbr.rel (%p673) target = $region56
        $region55: #{tpu_custom_call.1} parent=47 // pred_region
          %s676 = sand.u32 %s131, 1
          %s677 = scalar_lea.sflag [#allocation9], %s676
          %s678 = sand.u32 %s131, 1
          %s679 = smul.addr %s678, 2
          %s680 = scalar_lea.vmem [#allocation8], %s679
          %681 = dma.done %s677, 32
        $region56: #{tpu_custom_call.1} parent=47 // pred_fallthru
          _
      $region48: #{tpu_custom_call.1} parent=5 // pred_fallthru
        _
    $region6: #{tpu_custom_call.1} parent=1 // loop_footer
      %s24 = sadd.s32 1, %s20
    $region7: #{tpu_custom_call.1} parent=1 // loop_footer_branch
      %19 = sbr.rel target = $region3
    $region8: #{tpu_custom_call.1} parent=1 // loop_exit
      _
    %682 = vsyncpa [#allocation3], 1
    %s683 = scalar_lea.sflag [#allocation3], 1
    %684 = vsyncpa %s683, 1
    %685 = vsyncpa [#allocation6], 1
    %686 = vsyncpa [#allocation4], 1
    %s687 = scalar_lea.sflag [#allocation4], 1
    %688 = vsyncpa %s687, 1
    %689 = vsyncpa [#allocation9], 1
    %s690 = scalar_lea.sflag [#allocation9], 1
    %691 = vsyncpa %s690, 1

</llo_original>
